<compile_context>
chip_gen: v7x
topology: tpu7x:2x2x1
jax: 0.10.0
libtpu: 0.0.40
codegen_flags: <defaults>
</compile_context>

<pallas_src>
import functools

import jax
import jax.numpy as jnp
from jax import lax
from jax.experimental import pallas as pl
from jax.experimental.pallas import tpu as pltpu

LANES = 128            # TPU lane width (minor dim of every block)
TILE_ROWS_MAX = 8192   # 8192 x 128 x 4B = 4 MiB per f32 input block
NUM_SHARDS_MAX = 2     # v7x has 2 TensorCores; harmless on v5e/v6e
VMEM_LIMIT_CAP = 48 << 20


def _round_up(x: int, m: int) -> int:
    return ((x + m - 1) // m) * m


def _sublane_multiple(dtype) -> int:
    # Minimum sublane tile per dtype width (f32: 8, bf16: 16, int8/fp8: 32).
    itemsize = jnp.dtype(dtype).itemsize
    return {4: 8, 2: 16, 1: 32}.get(itemsize, 8)


def _make_mse_kernel(tile_rows: int, steps_per_shard: int, rows_valid: int,
                     needs_mask: bool, two_d_grid: bool, acc_rows: int):
    """Grid kernel over a lane-dense (rows, 128) slab."""
    groups = tile_rows // acc_rows

    def kernel(pred_ref, actual_ref, out_ref, acc_ref):
        if two_d_grid:
            s = pl.program_id(0)          # shard ("parallel")
            j = pl.program_id(1)          # sequential reduction ("arbitrary")
        else:
            s = 0
            j = pl.program_id(0)

        @pl.when(j == 0)
        def _init():
            acc_ref[...] = jnp.zeros_like(acc_ref)

        d = pred_ref[...].astype(jnp.float32) - actual_ref[...].astype(jnp.float32)

        def accumulate(x):
            sq = x * x
            # Pure-VALU partial reduce into a small vreg-sized accumulator:
            # (groups, acc_rows, 128) summed over axis 0 is whole-vreg adds.
            acc_ref[...] += jnp.sum(sq.reshape(groups, acc_rows, LANES), axis=0)

        if needs_mask:
            blk = s * steps_per_shard + j          # unclamped logical block id
            row_off = blk * tile_rows
            is_partial = row_off + tile_rows > rows_valid

            @pl.when(is_partial)
            def _masked():
                # Only partial / phantom blocks pay the iota + select.
                row_ids = row_off + lax.broadcasted_iota(
                    jnp.int32, (tile_rows, LANES), 0)
                accumulate(jnp.where(row_ids < rows_valid, d, 0.0))

            @pl.when(jnp.logical_not(is_partial))
            def _full():
                accumulate(d)
        else:
            accumulate(d)

        @pl.when(j == steps_per_shard - 1)
        def _finalize():
            # One small cross-lane/sublane reduction per shard.
            out_ref[...] = jnp.broadcast_to(jnp.sum(acc_ref[...]), out_ref.shape)

    return kernel


def mse_loss(param_pred: jax.Array, param_actual: jax.Array, *,
             tile_rows_max: int = TILE_ROWS_MAX,
             num_shards_max: int = NUM_SHARDS_MAX) -> jax.Array:
    """Pallas implementation of torch.nn.MSELoss()(param_pred, param_actual)."""
    assert param_pred.shape == param_actual.shape, "MSELoss requires equal shapes"
    n_elem = param_pred.size
    in_dtype = param_pred.dtype

    flat_p = param_pred.reshape(-1)
    flat_a = param_actual.reshape(-1)

    rows = n_elem // LANES
    rem = n_elem - rows * LANES

    # Sub-128-element tail: plain JAX (at most 127 elements, negligible).
    tail_sq = jnp.float32(0.0)
    if rem:
        tp = flat_p[rows * LANES:].astype(jnp.float32)
        ta = flat_a[rows * LANES:].astype(jnp.float32)
        tail_sq = jnp.sum((tp - ta) * (tp - ta))

    sub = _sublane_multiple(in_dtype)
    if rows < sub:
        # Tiny input: not even one full sublane tile -- plain JAX.
        head_sq = jnp.float32(0.0)
        if rows:
            hp = flat_p[: rows * LANES].astype(jnp.float32)
            ha = flat_a[: rows * LANES].astype(jnp.float32)
            head_sq = jnp.sum((hp - ha) * (hp - ha))
        return ((head_sq + tail_sq) / jnp.float32(n_elem)).astype(jnp.float32)

    if rem:
        slab_p = flat_p[: rows * LANES].reshape(rows, LANES)
        slab_a = flat_a[: rows * LANES].reshape(rows, LANES)
    else:
        slab_p = flat_p.reshape(rows, LANES)
        slab_a = flat_a.reshape(rows, LANES)

    # ---- Tile / grid sizing (all static, dtype-aware sublane rounding). ----
    tile_rows = min(_round_up(tile_rows_max, sub), _round_up(rows, sub))
    total_blocks = pl.cdiv(rows, tile_rows)
    num_shards = num_shards_max if total_blocks >= num_shards_max else 1
    steps = pl.cdiv(total_blocks, num_shards)
    # Mask only when the last block is partial or the shard split is uneven.
    needs_mask = (num_shards * steps * tile_rows) != rows
    two_d = num_shards > 1
    acc_rows = 64 if tile_rows % 64 == 0 else 8

    kernel = _make_mse_kernel(tile_rows, steps, rows, needs_mask, two_d, acc_rows)

    # Explicit scoped-VMEM budget: 2 inputs x 2 pipeline buffers + headroom.
    tile_bytes = tile_rows * LANES * jnp.dtype(in_dtype).itemsize
    vmem_limit = int(min(max(4 * tile_bytes + (8 << 20), 16 << 20), VMEM_LIMIT_CAP))

    cost = pl.CostEstimate(
        flops=3 * rows * LANES,
        transcendentals=0,
        bytes_accessed=2 * rows * LANES * jnp.dtype(in_dtype).itemsize
        + num_shards * 8 * LANES * 4,
    )

    if two_d:
        grid = (num_shards, steps)
        if num_shards * steps == total_blocks:
            in_map = lambda s, j: (s * steps + j, 0)
        else:
            # Clamp phantom iterations of an uneven shard split; their
            # contribution is zeroed by the row mask inside the kernel.
            in_map = lambda s, j: (jnp.minimum(s * steps + j, total_blocks - 1), 0)
        out_map = lambda s, j: (s, 0, 0)
        dims = ("parallel", "arbitrary")
    else:
        grid = (steps,)
        in_map = lambda j: (j, 0)
        out_map = lambda j: (0, 0, 0)
        dims = ("arbitrary",)

    partials = pl.pallas_call(
        kernel,
        out_shape=jax.ShapeDtypeStruct((num_shards, 8, LANES), jnp.float32),
        grid_spec=pltpu.PrefetchScalarGridSpec(
            num_scalar_prefetch=0,
            grid=grid,
            in_specs=[
                pl.BlockSpec((tile_rows, LANES), in_map),
                pl.BlockSpec((tile_rows, LANES), in_map),
            ],
            out_specs=pl.BlockSpec((1, 8, LANES), out_map),
            scratch_shapes=[pltpu.VMEM((acc_rows, LANES), jnp.float32)],
        ),
        compiler_params=pltpu.CompilerParams(
            dimension_semantics=dims,
            vmem_limit_bytes=vmem_limit,
        ),
        cost_estimate=cost,
    )(slab_p, slab_a)

    # Each shard broadcast its partial sum across its (8, 128) output block.
    sq_sum = jnp.sum(partials[:, 0, 0]) + tail_sq
    return (sq_sum / jnp.float32(n_elem)).astype(jnp.float32)


if __name__ == "__main__":
    key = jax.random.PRNGKey(0)
    k1, k2, k3, k4, k5, k6 = jax.random.split(key, 6)

    # 1) Small NCHW-like input -> single-block 1-D grid, unmasked fast path.
    pred = jax.random.normal(k1, (2, 4, 16, 16), dtype=jnp.float32)
    actual = jax.random.normal(k2, (2, 4, 16, 16), dtype=jnp.float32)
    loss = jax.jit(mse_loss)(pred, actual)
    jax.block_until_ready(loss)
    ref = jnp.mean((pred - actual) ** 2)
    assert jnp.allclose(loss, ref, rtol=1e-4, atol=1e-6), (loss, ref)

    # 2) Forced small tiles -> 2-D sharded grid, partial + phantom blocks.
    pred2 = jax.random.normal(k3, (4, 8, 40, 52), dtype=jnp.float32)
    actual2 = jax.random.normal(k4, (4, 8, 40, 52), dtype=jnp.float32)
    small_tile_mse = jax.jit(functools.partial(mse_loss, tile_rows_max=64))
    loss2 = small_tile_mse(pred2, actual2)
    jax.block_until_ready(loss2)
    ref2 = jnp.mean((pred2 - actual2) ** 2)
    assert jnp.allclose(loss2, ref2, rtol=1e-4, atol=1e-6), (loss2, ref2)

    # 3) Element count not a multiple of 128 -> kernel slab + plain-JAX tail.
    pred3 = jax.random.normal(k5, (7, 300), dtype=jnp.float32)
    actual3 = jax.random.normal(k6, (7, 300), dtype=jnp.float32)
    loss3 = jax.jit(mse_loss)(pred3, actual3)
    jax.block_until_ready(loss3)
    ref3 = jnp.mean((pred3 - actual3) ** 2)
    assert jnp.allclose(loss3, ref3, rtol=1e-4, atol=1e-6), (loss3, ref3)

    print("KERNEL_OK")
</pallas_src>

<mosaic_0001>
module attributes {stable_mosaic.version = 11 : i64} {
  func.func @kernel(%arg0: i32, %arg1: memref<16x128xf32, #tpu.memory_space<vmem>>, %arg2: memref<16x128xf32, #tpu.memory_space<vmem>>, %arg3: memref<1x8x128xf32, #tpu.memory_space<vmem>>, %arg4: memref<8x128xf32, #tpu.memory_space<vmem>>) attributes {dimension_semantics = [#tpu.dimension_semantics<arbitrary>], iteration_bounds = array<i64: 1>, scalar_prefetch = 0 : i64, scratch_operands = 1 : i64, tpu.core_type = #tpu.core_type<tc>, window_params = [{transform_indices = @transform_0, window_bounds = array<i64: 16, 128>}, {transform_indices = @transform_1, window_bounds = array<i64: 16, 128>}, {pipeline_mode = #tpu.pipeline_mode<synchronous>, transform_indices = @transform_2, window_bounds = array<i64: 1, 8, 128>}]} {
    %c0_i32 = arith.constant 0 : i32
    %0 = arith.cmpi eq, %arg0, %c0_i32 : i32
    %1 = arith.extui %0 : i1 to i32
    %c0_i32_0 = arith.constant 0 : i32
    %2 = arith.cmpi ne, %1, %c0_i32_0 : i32
    scf.if %2 {
      %cst_10 = arith.constant 0.000000e+00 : f32
      %15 = vector.broadcast %cst_10 : f32 to vector<8x128xf32>
      %c0_11 = arith.constant 0 : index
      %c0_12 = arith.constant 0 : index
      %16 = vector.load %arg4[%c0_11, %c0_12] : memref<8x128xf32, #tpu.memory_space<vmem>>, vector<8x128xf32>
      tpu.vector_store %arg4[%c0_11, %c0_12], %15 {strides = array<i32>} : memref<8x128xf32, #tpu.memory_space<vmem>>, vector<8x128xf32>,
    } else {
    }
    %c0 = arith.constant 0 : index
    %c0_1 = arith.constant 0 : index
    %3 = vector.load %arg1[%c0, %c0_1] : memref<16x128xf32, #tpu.memory_space<vmem>>, vector<16x128xf32>
    %c0_2 = arith.constant 0 : index
    %c0_3 = arith.constant 0 : index
    %4 = vector.load %arg2[%c0_2, %c0_3] : memref<16x128xf32, #tpu.memory_space<vmem>>, vector<16x128xf32>
    %5 = arith.subf %3, %4 : vector<16x128xf32>
    %6 = arith.mulf %5, %5 : vector<16x128xf32>
    %c0_4 = arith.constant 0 : index
    %c0_5 = arith.constant 0 : index
    %7 = vector.load %arg4[%c0_4, %c0_5] : memref<8x128xf32, #tpu.memory_space<vmem>>, vector<8x128xf32>
    %8 = vector.shape_cast %6 : vector<16x128xf32> to vector<2x8x128xf32>
    %cst = arith.constant dense<0.000000e+00> : vector<8x128xf32>
    %9 = vector.multi_reduction <add>, %8, %cst [0] : vector<2x8x128xf32> to vector<8x128xf32>
    %10 = arith.addf %7, %9 : vector<8x128xf32>
    %c0_6 = arith.constant 0 : index
    %c0_7 = arith.constant 0 : index
    %11 = vector.load %arg4[%c0_6, %c0_7] : memref<8x128xf32, #tpu.memory_space<vmem>>, vector<8x128xf32>
    tpu.vector_store %arg4[%c0_6, %c0_7], %10 {strides = array<i32>} : memref<8x128xf32, #tpu.memory_space<vmem>>, vector<8x128xf32>,
    %c0_i32_8 = arith.constant 0 : i32
    %12 = arith.cmpi eq, %arg0, %c0_i32_8 : i32
    %13 = arith.extui %12 : i1 to i32
    %c0_i32_9 = arith.constant 0 : i32
    %14 = arith.cmpi ne, %13, %c0_i32_9 : i32
    scf.if %14 {
      %c0_10 = arith.constant 0 : index
      %c0_11 = arith.constant 0 : index
      %15 = vector.load %arg4[%c0_10, %c0_11] : memref<8x128xf32, #tpu.memory_space<vmem>>, vector<8x128xf32>
      %16 = vector.shape_cast %15 : vector<8x128xf32> to vector<1x8x128xf32>
      %cst_12 = arith.constant dense<0.000000e+00> : vector<1xf32>
      %17 = vector.multi_reduction <add>, %16, %cst_12 [1, 2] : vector<1x8x128xf32> to vector<1xf32>
      %18 = vector.shape_cast %17 : vector<1xf32> to vector<1x1x1xf32>
      %19 = vector.extract %18[0, 0, 0] : f32 from vector<1x1x1xf32>
      %20 = vector.broadcast %19 : f32 to vector<1x8x128xf32>
      %c0_13 = arith.constant 0 : index
      %c0_14 = arith.constant 0 : index
      %c0_15 = arith.constant 0 : index
      %21 = vector.load %arg3[%c0_13, %c0_14, %c0_15] : memref<1x8x128xf32, #tpu.memory_space<vmem>>, vector<1x8x128xf32>
      tpu.vector_store %arg3[%c0_13, %c0_14, %c0_15], %20 {strides = array<i32>} : memref<1x8x128xf32, #tpu.memory_space<vmem>>, vector<1x8x128xf32>,
    } else {
    }
    return
  }
  func.func @transform_0(%arg0: i32) -> (i32, i32) {
    %c0_i32 = arith.constant 0 : i32
    %c0_i32_0 = arith.constant 0 : i32
    return %arg0, %c0_i32 : i32, i32
  }
  func.func @transform_1(%arg0: i32) -> (i32, i32) {
    %c0_i32 = arith.constant 0 : i32
    %c0_i32_0 = arith.constant 0 : i32
    return %arg0, %c0_i32 : i32, i32
  }
  func.func @transform_2(%arg0: i32) -> (i32, i32, i32) {
    %c0_i32 = arith.constant 0 : i32
    %c0_i32_0 = arith.constant 0 : i32
    %c0_i32_1 = arith.constant 0 : i32
    %c0_i32_2 = arith.constant 0 : i32
    return %c0_i32, %c0_i32_0, %c0_i32_1 : i32, i32, i32
  }
}

</mosaic_0001>

<llo_original>
// kernel: mse_loss.1
$region0: #{mse_loss.1}
  #allocation0 [shape = 'u32[]', space=smem, size = 0x4, offset = 0x4, fixed_abs, tag = 'smem constant byte address 0x4 - core index']
  #allocation1 [shape = 'u32[144,128]{1,0:T(1,128)}', space=vmem, size = 0x12000, scoped, tag = 'internal scratch']
  #allocation2 [shape = 'f32[8,128]{1,0:T(8,128)}', space=vmem, size = 0x1000, scoped, tag = 'scratch operand']
  %s0 = inlined_call_operand.vmem [shape: f32[16,128], index: 0, kind: input, shape index: {}]
  %s1 = inlined_call_operand.vmem [shape: f32[16,128], index: 1, kind: input, shape index: {}]
  %s2 = inlined_call_operand.vmem [shape: f32[1,8,128], index: 2, kind: output, shape index: {}]
  %s3 = sld [smem:[#allocation0]]
  $region26: #{mse_loss.1} parent=0
    _
  %s5 = ssub.s32 1, %s3
  %s6 = scalar_select 0, %s5, %s3
  // Predicated region
  $region2: #{mse_loss.1} parent=0 // pred_check
    _
  $region3: #{mse_loss.1} parent=0 // pred_check_branch
    %8 = sbr.rel (0) target = $region5
  $region4: #{mse_loss.1} parent=0 // pred_region
    _
  $region5: #{mse_loss.1} parent=0 // pred_fallthru
    _
  // Predicated region
  $region6: #{mse_loss.1} parent=0 // pred_check
    _
  $region7: #{mse_loss.1} parent=0 // pred_check_branch
    %10 = sbr.rel (0) target = $region9
  $region8: #{mse_loss.1} parent=0 // pred_region
    _
  $region9: #{mse_loss.1} parent=0 // pred_fallthru
    _
  %p11 = scmp.eq.s32.totalorder 0, 0
  // Predicated region
  $region10: #{mse_loss.1} parent=0 // pred_check
    %p12 = pneg %p11
  $region11: #{mse_loss.1} parent=0 // pred_check_branch
    %14 = sbr.rel (%p12) target = $region13
  $region12: #{mse_loss.1} parent=0 // pred_region
    %15 = vst [vmem:[#allocation2] sm:$0xff] 0.0
  $region13: #{mse_loss.1} parent=0 // pred_fallthru
    _
  %v16 = vld [vmem:[%s0] sm:$0xff]
  %v17 = vld [vmem:[%s0 + $0x8] sm:$0xff]
  %v18 = vld [vmem:[%s1] sm:$0xff]
  %v19 = vld [vmem:[%s1 + $0x8] sm:$0xff]
  %v20 = vsub.f32 %v16, %v18
  %v21 = vsub.f32 %v17, %v19
  %v22 = vmul.f32 %v20, %v20
  %v23 = vmul.f32 %v21, %v21
  %v24 = vld [vmem:[#allocation2] sm:$0xff]
  %v25 = vadd.f32 %v22, %v23
  %v26 = vadd.f32 %v24, %v25
  %27 = vst [vmem:[#allocation2] sm:$0xff] %v26
  // Predicated region
  $region14: #{mse_loss.1} parent=0 // pred_check
    %p28 = pneg %p11
  $region15: #{mse_loss.1} parent=0 // pred_check_branch
    %30 = sbr.rel (%p28) target = $region17
  $region16: #{mse_loss.1} parent=0 // pred_region
    %v31 = vld [vmem:[#allocation2] sm:$0xff]
    %32 = vadd.xlane.f32.xlu0 %v31
    %v33 = vpop.xlane.xlu0 %32
    %v34 = vrot.slane %v33, 4
    %v35 = vadd.f32 %v33, %v34
    %v36 = vrot.slane %v35, 2
    %v37 = vadd.f32 %v35, %v36
    %v38 = vrot.slane %v37, 1
    %v39 = vadd.f32 %v37, %v38
    %s40 = vtos %v39
    %v41 = vstv %s40
    %42 = vst [vmem:[%s2] sm:$0xff] %v41
  $region17: #{mse_loss.1} parent=0 // pred_fallthru
    _
  // Predicated region
  $region18: #{mse_loss.1} parent=0 // pred_check
    _
  $region19: #{mse_loss.1} parent=0 // pred_check_branch
    %44 = sbr.rel (0) target = $region21
  $region20: #{mse_loss.1} parent=0 // pred_region
    _
  $region21: #{mse_loss.1} parent=0 // pred_fallthru
    _
  // Predicated region
  $region22: #{mse_loss.1} parent=0 // pred_check
    _
  $region23: #{mse_loss.1} parent=0 // pred_check_branch
    %46 = sbr.rel (0) target = $region25
  $region24: #{mse_loss.1} parent=0 // pred_region
    _
  $region25: #{mse_loss.1} parent=0 // pred_fallthru
    _

</llo_original>
